<compile_context>
chip_gen: v6e
topology: v6e:2x2x1
jax: 0.10.0
libtpu: 0.0.40
codegen_flags: <defaults>
</compile_context>

<pallas_src>
import functools

import jax
import jax.numpy as jnp
from jax.experimental import pallas as pl
from jax.experimental.pallas import tpu as pltpu


def _round_up(n, m):
    return ((n + m - 1) // m) * m


def _sage_conv_kernel(a_ref, x_ref, xdst_ref, w_ref, b_ref, mask_ref,
                      o_ref, acc_ref, *, relu_dropout):
    k = pl.program_id(1)

    @pl.when(k == 0)
    def _():
        acc_ref[...] = jnp.zeros_like(acc_ref)

    # Neighbor-mean partial sum: A_norm[m_tile, k_tile] @ x[k_tile, :]  (bf16 -> f32 acc)
    acc_ref[...] += jnp.dot(a_ref[...], x_ref[...],
                            preferred_element_type=jnp.float32)

    @pl.when(k == pl.num_programs(1) - 1)
    def _():
        # Single fused projection: concat([h_neigh, h_self], -1) @ W_cat + b
        h_cat = jnp.concatenate(
            [acc_ref[...].astype(jnp.bfloat16), xdst_ref[...]], axis=-1)
        h = jnp.dot(h_cat, w_ref[...], preferred_element_type=jnp.float32)
        h = h + b_ref[...]
        if relu_dropout:
            h = jnp.maximum(h, 0.0) * mask_ref[...]   # mask is pre-scaled by 1/(1-p)
        o_ref[...] = h.astype(o_ref.dtype)


def sage_conv(x, a_norm, w_neigh, w_self, bias, *, relu_dropout,
              dropout_key=None, dropout_p=0.5, tm_max=256, tk_max=1024):
    """One SAGEConv('mean') layer, optionally fused with ReLU + Dropout(p)."""
    num_dst, num_src = a_norm.shape
    f_in = x.shape[1]
    f_out = w_neigh.shape[1]

    # ---- lane-dense feature padding + tile-friendly row/col padding ----
    fin_p = _round_up(f_in, 128)
    fout_p = _round_up(f_out, 128)
    tm = min(tm_max, _round_up(num_dst, 8))
    tk = min(tk_max, _round_up(num_src, 128))
    m_pad = _round_up(num_dst, tm)
    s_pad = _round_up(num_src, tk)

    x_p = jnp.zeros((s_pad, fin_p), jnp.bfloat16).at[:num_src, :f_in].set(
        x.astype(jnp.bfloat16))
    xdst_p = jnp.zeros((m_pad, fin_p), jnp.bfloat16).at[:num_dst, :f_in].set(
        x[:num_dst].astype(jnp.bfloat16))
    a_p = jnp.zeros((m_pad, s_pad), jnp.bfloat16).at[:num_dst, :num_src].set(
        a_norm.astype(jnp.bfloat16))

    w_cat = jnp.zeros((2 * fin_p, fout_p), jnp.bfloat16)
    w_cat = w_cat.at[:f_in, :f_out].set(w_neigh.astype(jnp.bfloat16))
    w_cat = w_cat.at[fin_p:fin_p + f_in, :f_out].set(w_self.astype(jnp.bfloat16))
    b_p = jnp.zeros((1, fout_p), jnp.float32).at[:, :f_out].set(
        bias.reshape(1, -1).astype(jnp.float32))

    if relu_dropout:
        keep = jax.random.bernoulli(dropout_key, 1.0 - dropout_p, (m_pad, fout_p))
        mask = keep.astype(jnp.float32) * (1.0 / (1.0 - dropout_p))
    else:
        mask = jnp.ones((m_pad, fout_p), jnp.float32)

    grid = (m_pad // tm, s_pad // tk)

    # Rough per-call VMEM footprint (double-buffered in/out + accumulator), capped v7x-safe.
    tile_bytes = (tm * tk * 2 + tk * fin_p * 2 + tm * fin_p * 2
                  + 2 * fin_p * fout_p * 2 + fout_p * 4
                  + tm * fout_p * 4 + tm * fout_p * 4)
    vmem_limit = int(min(max(2 * tile_bytes + tm * fin_p * 4, 32 << 20), 64 << 20))

    kernel = functools.partial(_sage_conv_kernel, relu_dropout=relu_dropout)
    out_p = pl.pallas_call(
        kernel,
        out_shape=jax.ShapeDtypeStruct((m_pad, fout_p), jnp.float32),
        grid_spec=pltpu.PrefetchScalarGridSpec(
            num_scalar_prefetch=0,
            grid=grid,
            in_specs=[
                pl.BlockSpec((tm, tk), lambda m, k: (m, k)),             # A_norm tile
                pl.BlockSpec((tk, fin_p), lambda m, k: (k, 0)),          # x K-slab
                pl.BlockSpec((tm, fin_p), lambda m, k: (m, 0)),          # x_dst (self)
                pl.BlockSpec((2 * fin_p, fout_p), lambda m, k: (0, 0)),  # W_cat
                pl.BlockSpec((1, fout_p), lambda m, k: (0, 0)),          # bias
                pl.BlockSpec((tm, fout_p), lambda m, k: (m, 0)),         # dropout mask
            ],
            out_specs=pl.BlockSpec((tm, fout_p), lambda m, k: (m, 0)),
            scratch_shapes=[pltpu.VMEM((tm, fin_p), jnp.float32)],
        ),
        compiler_params=pltpu.CompilerParams(
            dimension_semantics=("parallel", "arbitrary"),
            vmem_limit_bytes=vmem_limit,
        ),
    )(a_p, x_p, xdst_p, w_cat, b_p, mask)

    return out_p[:num_dst, :f_out]


def sage_forward(params, blocks, x, key):
    """Mirrors Sage.forward: h = SAGEConv(block, h) per layer; ReLU + Dropout(0.5)
    after every layer except the last (training-mode dropout semantics)."""
    h = x
    n_layers = len(params)
    keys = jax.random.split(key, n_layers)
    for l_id, ((w_neigh, w_self, b), a_norm) in enumerate(zip(params, blocks)):
        is_hidden = l_id != n_layers - 1
        h = sage_conv(h, a_norm, w_neigh, w_self, b,
                      relu_dropout=is_hidden, dropout_key=keys[l_id])
    return h


def make_block(key, num_dst, num_src, p=0.3):
    """Dense row-normalized adjacency for a DGL-style bipartite block
    (self contributes only through W_self, matching SAGEConv('mean'))."""
    adj = (jax.random.uniform(key, (num_dst, num_src)) < p).astype(jnp.float32)
    deg = jnp.maximum(adj.sum(axis=1, keepdims=True), 1.0)
    return adj / deg


def init_params(key, in_size, hid_size, out_size):
    """Synthetic weights matching SAGEConv(in,hid) / SAGEConv(hid,out)."""
    sizes = [(in_size, hid_size), (hid_size, out_size)]
    params = []
    for fi, fo in sizes:
        k1, k2, key = jax.random.split(key, 3)
        scale = 1.0 / jnp.sqrt(2.0 * fi)     # fan_in of the concat(2*fi) linear
        w_neigh = (scale * jax.random.normal(k1, (fi, fo))).astype(jnp.float32)
        w_self = (scale * jax.random.normal(k2, (fi, fo))).astype(jnp.float32)
        b = jnp.zeros((fo,), dtype=jnp.float32)
        params.append((w_neigh, w_self, b))
    return params


if __name__ == "__main__":
    # small shapes: in=32, hid=64, out=16; sampled block sizes 64 -> 32 -> 16 nodes
    in_size, hid_size, out_size = 32, 64, 16
    num_src, num_dst1, num_dst2 = 64, 32, 16

    key = jax.random.PRNGKey(0)
    kx, kb1, kb2, kp, kd = jax.random.split(key, 5)

    x = jax.random.normal(kx, (num_src, in_size), dtype=jnp.float32)
    blocks = [make_block(kb1, num_dst1, num_src),
              make_block(kb2, num_dst2, num_dst1)]
    params = init_params(kp, in_size, hid_size, out_size)

    out = sage_forward(params, blocks, x, kd)
    out = jax.block_until_ready(out)
    assert out.shape == (num_dst2, out_size) and out.dtype == jnp.float32
    assert bool(jnp.all(jnp.isfinite(out)))
    print("KERNEL_OK")
</pallas_src>

<mosaic_0001>
module attributes {stable_mosaic.version = 11 : i64} {
  func.func @_sage_conv_kernel(%arg0: i32, %arg1: i32, %arg2: memref<32x128xbf16, #tpu.memory_space<vmem>>, %arg3: memref<128x128xbf16, #tpu.memory_space<vmem>>, %arg4: memref<32x128xbf16, #tpu.memory_space<vmem>>, %arg5: memref<256x128xbf16, #tpu.memory_space<vmem>>, %arg6: memref<1x128xf32, #tpu.memory_space<vmem>>, %arg7: memref<32x128xf32, #tpu.memory_space<vmem>>, %arg8: memref<32x128xf32, #tpu.memory_space<vmem>>, %arg9: memref<32x128xf32, #tpu.memory_space<vmem>>) attributes {dimension_semantics = [#tpu.dimension_semantics<parallel>, #tpu.dimension_semantics<arbitrary>], iteration_bounds = array<i64: 1, 1>, scalar_prefetch = 0 : i64, scratch_operands = 1 : i64, tpu.core_type = #tpu.core_type<tc>, window_params = [{transform_indices = @transform_0, window_bounds = array<i64: 32, 128>}, {transform_indices = @transform_1, window_bounds = array<i64: 128, 128>}, {transform_indices = @transform_2, window_bounds = array<i64: 32, 128>}, {pipeline_mode = #tpu.pipeline_mode<synchronous>, transform_indices = @transform_3, window_bounds = array<i64: 256, 128>}, {pipeline_mode = #tpu.pipeline_mode<synchronous>, transform_indices = @transform_4, window_bounds = array<i64: 1, 128>}, {transform_indices = @transform_5, window_bounds = array<i64: 32, 128>}, {transform_indices = @transform_6, window_bounds = array<i64: 32, 128>}]} {
    %c0_i32 = arith.constant 0 : i32
    %0 = arith.cmpi eq, %arg1, %c0_i32 : i32
    %1 = arith.extui %0 : i1 to i32
    %c0_i32_0 = arith.constant 0 : i32
    %2 = arith.cmpi ne, %1, %c0_i32_0 : i32
    scf.if %2 {
      %cst_10 = arith.constant 0.000000e+00 : f32
      %12 = vector.broadcast %cst_10 : f32 to vector<32x128xf32>
      %c0_11 = arith.constant 0 : index
      %c0_12 = arith.constant 0 : index
      %13 = vector.load %arg9[%c0_11, %c0_12] : memref<32x128xf32, #tpu.memory_space<vmem>>, vector<32x128xf32>
      tpu.vector_store %arg9[%c0_11, %c0_12], %12 {strides = array<i32>} : memref<32x128xf32, #tpu.memory_space<vmem>>, vector<32x128xf32>,
    } else {
    }
    %c0 = arith.constant 0 : index
    %c0_1 = arith.constant 0 : index
    %3 = vector.load %arg9[%c0, %c0_1] : memref<32x128xf32, #tpu.memory_space<vmem>>, vector<32x128xf32>
    %c0_2 = arith.constant 0 : index
    %c0_3 = arith.constant 0 : index
    %4 = vector.load %arg2[%c0_2, %c0_3] : memref<32x128xbf16, #tpu.memory_space<vmem>>, vector<32x128xbf16>
    %c0_4 = arith.constant 0 : index
    %c0_5 = arith.constant 0 : index
    %5 = vector.load %arg3[%c0_4, %c0_5] : memref<128x128xbf16, #tpu.memory_space<vmem>>, vector<128x128xbf16>
    %cst = arith.constant dense<0.000000e+00> : vector<32x128xf32>
    %6 = tpu.matmul %4, %5, %cst {dimension_numbers = #tpu.dot_dimension_numbers<[1], [0], [0], [1], [0, 0, 1, 1], [], []>} : vector<32x128xbf16>, vector<128x128xbf16>, vector<32x128xf32> -> vector<32x128xf32>
    %7 = arith.addf %3, %6 : vector<32x128xf32>
    %c0_6 = arith.constant 0 : index
    %c0_7 = arith.constant 0 : index
    %8 = vector.load %arg9[%c0_6, %c0_7] : memref<32x128xf32, #tpu.memory_space<vmem>>, vector<32x128xf32>
    tpu.vector_store %arg9[%c0_6, %c0_7], %7 {strides = array<i32>} : memref<32x128xf32, #tpu.memory_space<vmem>>, vector<32x128xf32>,
    %c0_i32_8 = arith.constant 0 : i32
    %9 = arith.cmpi eq, %arg1, %c0_i32_8 : i32
    %10 = arith.extui %9 : i1 to i32
    %c0_i32_9 = arith.constant 0 : i32
    %11 = arith.cmpi ne, %10, %c0_i32_9 : i32
    scf.if %11 {
      %c0_10 = arith.constant 0 : index
      %c0_11 = arith.constant 0 : index
      %12 = vector.load %arg9[%c0_10, %c0_11] : memref<32x128xf32, #tpu.memory_space<vmem>>, vector<32x128xf32>
      %13 = arith.truncf %12 : vector<32x128xf32> to vector<32x128xbf16>
      %c0_12 = arith.constant 0 : index
      %c0_13 = arith.constant 0 : index
      %14 = vector.load %arg4[%c0_12, %c0_13] : memref<32x128xbf16, #tpu.memory_space<vmem>>, vector<32x128xbf16>
      %15 = tpu.concatenate %13, %14 in 1 : vector<32x128xbf16>, vector<32x128xbf16> -> vector<32x256xbf16>
      %c0_14 = arith.constant 0 : index
      %c0_15 = arith.constant 0 : index
      %16 = vector.load %arg5[%c0_14, %c0_15] : memref<256x128xbf16, #tpu.memory_space<vmem>>, vector<256x128xbf16>
      %cst_16 = arith.constant dense<0.000000e+00> : vector<32x128xf32>
      %17 = tpu.matmul %15, %16, %cst_16 {dimension_numbers = #tpu.dot_dimension_numbers<[1], [0], [0], [1], [0, 0, 1, 1], [], []>} : vector<32x256xbf16>, vector<256x128xbf16>, vector<32x128xf32> -> vector<32x128xf32>
      %c0_17 = arith.constant 0 : index
      %c0_18 = arith.constant 0 : index
      %18 = vector.load %arg6[%c0_17, %c0_18] : memref<1x128xf32, #tpu.memory_space<vmem>>, vector<1x128xf32>
      %19 = vector.broadcast %18 : vector<1x128xf32> to vector<32x128xf32>
      %20 = arith.addf %17, %19 : vector<32x128xf32>
      %cst_19 = arith.constant 0.000000e+00 : f32
      %21 = vector.broadcast %cst_19 : f32 to vector<32x128xf32>
      %22 = arith.maximumf %20, %21 : vector<32x128xf32>
      %c0_20 = arith.constant 0 : index
      %c0_21 = arith.constant 0 : index
      %23 = vector.load %arg7[%c0_20, %c0_21] : memref<32x128xf32, #tpu.memory_space<vmem>>, vector<32x128xf32>
      %24 = arith.mulf %22, %23 : vector<32x128xf32>
      %c0_22 = arith.constant 0 : index
      %c0_23 = arith.constant 0 : index
      %25 = vector.load %arg8[%c0_22, %c0_23] : memref<32x128xf32, #tpu.memory_space<vmem>>, vector<32x128xf32>
      tpu.vector_store %arg8[%c0_22, %c0_23], %24 {strides = array<i32>} : memref<32x128xf32, #tpu.memory_space<vmem>>, vector<32x128xf32>,
    } else {
    }
    return
  }
  func.func @transform_0(%arg0: i32, %arg1: i32) -> (i32, i32) {
    %c0_i32 = arith.constant 0 : i32
    return %arg0, %arg1 : i32, i32
  }
  func.func @transform_1(%arg0: i32, %arg1: i32) -> (i32, i32) {
    %c0_i32 = arith.constant 0 : i32
    %c0_i32_0 = arith.constant 0 : i32
    return %arg1, %c0_i32 : i32, i32
  }
  func.func @transform_2(%arg0: i32, %arg1: i32) -> (i32, i32) {
    %c0_i32 = arith.constant 0 : i32
    %c0_i32_0 = arith.constant 0 : i32
    return %arg0, %c0_i32 : i32, i32
  }
  func.func @transform_3(%arg0: i32, %arg1: i32) -> (i32, i32) {
    %c0_i32 = arith.constant 0 : i32
    %c0_i32_0 = arith.constant 0 : i32
    %c0_i32_1 = arith.constant 0 : i32
    return %c0_i32, %c0_i32_0 : i32, i32
  }
  func.func @transform_4(%arg0: i32, %arg1: i32) -> (i32, i32) {
    %c0_i32 = arith.constant 0 : i32
    %c0_i32_0 = arith.constant 0 : i32
    %c0_i32_1 = arith.constant 0 : i32
    return %c0_i32, %c0_i32_0 : i32, i32
  }
  func.func @transform_5(%arg0: i32, %arg1: i32) -> (i32, i32) {
    %c0_i32 = arith.constant 0 : i32
    %c0_i32_0 = arith.constant 0 : i32
    return %arg0, %c0_i32 : i32, i32
  }
  func.func @transform_6(%arg0: i32, %arg1: i32) -> (i32, i32) {
    %c0_i32 = arith.constant 0 : i32
    %c0_i32_0 = arith.constant 0 : i32
    return %arg0, %c0_i32 : i32, i32
  }
}

</mosaic_0001>

<llo_original>
// kernel: tpu_custom_call.1
$region0: #{tpu_custom_call.1}
  #allocation0 [shape = 'u32[]', space=smem, size = 0x4, offset = 0x4, fixed_abs, tag = 'smem constant byte address 0x4 - core index']
  #allocation1 [shape = 'u32[144,128]{1,0:T(1,128)}', space=vmem, size = 0x12000, scoped, tag = 'internal scratch']
  #allocation2 [shape = 'f32[32,128]{1,0:T(8,128)}', space=vmem, size = 0x4000, scoped, tag = 'scratch operand']
  %s0 = inlined_call_operand.hbm [shape: bf16[32,128], index: 0, kind: input, shape index: {}]
  %s1 = inlined_call_operand.hbm [shape: bf16[128,128], index: 1, kind: input, shape index: {}]
  %s2 = inlined_call_operand.hbm [shape: bf16[32,128], index: 2, kind: input, shape index: {}]
  %s3 = inlined_call_operand.hbm [shape: bf16[256,128], index: 3, kind: input, shape index: {}]
  %s4 = inlined_call_operand.vmem [shape: f32[1,128], index: 4, kind: input, shape index: {}]
  %s5 = inlined_call_operand.hbm [shape: f32[32,128], index: 5, kind: input, shape index: {}]
  %s6 = inlined_call_operand.hbm [shape: f32[32,128], index: 6, kind: output, shape index: {}]
  %s7 = sld [smem:[#allocation0]]
  $region62: #{tpu_custom_call.1} parent=0
    _
  %s9 = ssub.s32 1, %s7
  %s10 = scalar_select 0, %s9, %s7
  $region1: #{tpu_custom_call.1} parent=0
    #allocation3 [shape = 'u8[8192]{0}', space=vmem, size = 0x2000, scoped, tag = 'input window, operand 0, single buffered']
    #allocation4 [shape = 's32[1]{0}', space=sflag, size = 0x4, scoped, tag = 'scoped memory for tpu_custom_call.1']
    #allocation5 [shape = 's32[1]{0}', space=sflag, size = 0x4, scoped, tag = 'scoped memory for tpu_custom_call.1']
    #allocation6 [shape = 'u8[32768]{0}', space=vmem, size = 0x8000, scoped, tag = 'input window, operand 1, single buffered']
    #allocation7 [shape = 's32[1]{0}', space=sflag, size = 0x4, scoped, tag = 'scoped memory for tpu_custom_call.1']
    #allocation8 [shape = 'u8[8192]{0}', space=vmem, size = 0x2000, scoped, tag = 'input window, operand 2, single buffered']
    #allocation9 [shape = 'u8[65536]{0}', space=vmem, size = 0x10000, scoped, tag = 'input window, operand 3, single buffered']
    #allocation10 [shape = 's32[1]{0}', space=sflag, size = 0x4, scoped, tag = 'scoped memory for tpu_custom_call.1']
    #allocation11 [shape = 'u8[16384]{0}', space=vmem, size = 0x4000, scoped, tag = 'input window, operand 5, single buffered']
    #allocation12 [shape = 'u8[16384]{0}', space=vmem, size = 0x4000, scoped, tag = 'output window, operand 0, single buffered']
    %11 = vsyncpa [#allocation4], 0
    %12 = vsyncpa [#allocation7], 0
    %13 = vsyncpa [#allocation10], 0
    %14 = vsyncpa [#allocation5], 0
    // Predicated region
    $region2: #{tpu_custom_call.1} parent=1 // pred_check
      _
    $region3: #{tpu_custom_call.1} parent=1 // pred_check_branch
      %16 = sbr.rel (0) target = $region5
    $region4: #{tpu_custom_call.1} parent=1 // pred_region
      %s18 = ssub.s32 256, 256
      %19 = vsyncadd [#allocation4], %s18
      %s20 = sshll.u32 [#allocation3], 4
      %s21 = int_to_ptr.vmem [resolvable:$true] %s20
      %26 = dma.hbm_to_vmem [thread:$0]  %s0, 256, %s21, [#allocation4], 64, 64, 4
    $region5: #{tpu_custom_call.1} parent=1 // pred_fallthru
      _
    // Predicated region
    $region6: #{tpu_custom_call.1} parent=1 // pred_check
      _
    $region7: #{tpu_custom_call.1} parent=1 // pred_check_branch
      %28 = sbr.rel (0) target = $region9
    $region8: #{tpu_custom_call.1} parent=1 // pred_region
      %s30 = ssub.s32 1024, 1024
      %31 = vsyncadd [#allocation7], %s30
      %s32 = sshll.u32 [#allocation6], 4
      %s33 = int_to_ptr.vmem [resolvable:$true] %s32
      %38 = dma.hbm_to_vmem [thread:$0]  %s1, 1024, %s33, [#allocation7], 64, 64, 4
    $region9: #{tpu_custom_call.1} parent=1 // pred_fallthru
      _
    // Predicated region
    $region10: #{tpu_custom_call.1} parent=1 // pred_check
      _
    $region11: #{tpu_custom_call.1} parent=1 // pred_check_branch
      %40 = sbr.rel (0) target = $region13
    $region12: #{tpu_custom_call.1} parent=1 // pred_region
      %s42 = ssub.s32 256, 256
      %43 = vsyncadd [#allocation7], %s42
      %s44 = sshll.u32 [#allocation8], 4
      %s45 = int_to_ptr.vmem [resolvable:$true] %s44
      %50 = dma.hbm_to_vmem [thread:$0]  %s2, 256, %s45, [#allocation7], 64, 64, 4
    $region13: #{tpu_custom_call.1} parent=1 // pred_fallthru
      _
    // Predicated region
    $region14: #{tpu_custom_call.1} parent=1 // pred_check
      _
    $region15: #{tpu_custom_call.1} parent=1 // pred_check_branch
      %52 = sbr.rel (0) target = $region17
    $region16: #{tpu_custom_call.1} parent=1 // pred_region
      %s54 = ssub.s32 2048, 2048
      %55 = vsyncadd [#allocation10], %s54
      %s56 = sshll.u32 [#allocation9], 4
      %s57 = int_to_ptr.vmem [resolvable:$true] %s56
      %62 = dma.hbm_to_vmem [thread:$0]  %s3, 2048, %s57, [#allocation10], 64, 64, 4
    $region17: #{tpu_custom_call.1} parent=1 // pred_fallthru
      _
    // Predicated region
    $region18: #{tpu_custom_call.1} parent=1 // pred_check
      _
    $region19: #{tpu_custom_call.1} parent=1 // pred_check_branch
      %64 = sbr.rel (0) target = $region21
    $region20: #{tpu_custom_call.1} parent=1 // pred_region
      _
    $region21: #{tpu_custom_call.1} parent=1 // pred_fallthru
      _
    // Predicated region
    $region22: #{tpu_custom_call.1} parent=1 // pred_check
      _
    $region23: #{tpu_custom_call.1} parent=1 // pred_check_branch
      %66 = sbr.rel (0) target = $region25
    $region24: #{tpu_custom_call.1} parent=1 // pred_region
      %s68 = ssub.s32 512, 512
      %69 = vsyncadd [#allocation10], %s68
      %s70 = sshll.u32 [#allocation11], 4
      %s71 = int_to_ptr.vmem [resolvable:$true] %s70
      %76 = dma.hbm_to_vmem [thread:$0]  %s5, 512, %s71, [#allocation10], 128, 128, 8
    $region25: #{tpu_custom_call.1} parent=1 // pred_fallthru
      _
    // Predicated region
    $region26: #{tpu_custom_call.1} parent=1 // pred_check
      _
    $region27: #{tpu_custom_call.1} parent=1 // pred_check_branch
      %78 = sbr.rel (0) target = $region29
    $region28: #{tpu_custom_call.1} parent=1 // pred_region
      %79 = dma.done [#allocation4], 256
    $region29: #{tpu_custom_call.1} parent=1 // pred_fallthru
      _
    // Predicated region
    $region30: #{tpu_custom_call.1} parent=1 // pred_check
      _
    $region31: #{tpu_custom_call.1} parent=1 // pred_check_branch
      %81 = sbr.rel (0) target = $region33
    $region32: #{tpu_custom_call.1} parent=1 // pred_region
      %82 = dma.done [#allocation7], 1024
    $region33: #{tpu_custom_call.1} parent=1 // pred_fallthru
      _
    // Predicated region
    $region34: #{tpu_custom_call.1} parent=1 // pred_check
      _
    $region35: #{tpu_custom_call.1} parent=1 // pred_check_branch
      %84 = sbr.rel (0) target = $region37
    $region36: #{tpu_custom_call.1} parent=1 // pred_region
      %85 = dma.done [#allocation7], 256
    $region37: #{tpu_custom_call.1} parent=1 // pred_fallthru
      _
    // Predicated region
    $region38: #{tpu_custom_call.1} parent=1 // pred_check
      _
    $region39: #{tpu_custom_call.1} parent=1 // pred_check_branch
      %87 = sbr.rel (0) target = $region41
    $region40: #{tpu_custom_call.1} parent=1 // pred_region
      %88 = dma.done [#allocation10], 2048
    $region41: #{tpu_custom_call.1} parent=1 // pred_fallthru
      _
    // Predicated region
    $region42: #{tpu_custom_call.1} parent=1 // pred_check
      _
    $region43: #{tpu_custom_call.1} parent=1 // pred_check_branch
      %90 = sbr.rel (0) target = $region45
    $region44: #{tpu_custom_call.1} parent=1 // pred_region
      %91 = dma.done [#allocation10], 512
    $region45: #{tpu_custom_call.1} parent=1 // pred_fallthru
      _
    %p93 = scmp.eq.s32.totalorder 0, 0
    // Predicated region
    $region46: #{tpu_custom_call.1} parent=1 // pred_check
      %p94 = pneg %p93
    $region47: #{tpu_custom_call.1} parent=1 // pred_check_branch
      %96 = sbr.rel (%p94) target = $region49
    $region48: #{tpu_custom_call.1} parent=1 // pred_region
      %97 = vst [vmem:[#allocation2] sm:$0xff] 0.0
      %98 = vst [vmem:[#allocation2 + $0x8] sm:$0xff] 0.0
      %99 = vst [vmem:[#allocation2 + $0x10] sm:$0xff] 0.0
      %100 = vst [vmem:[#allocation2 + $0x18] sm:$0xff] 0.0
    $region49: #{tpu_custom_call.1} parent=1 // pred_fallthru
      _
    %v101 = vld [vmem:[#allocation2] sm:$0xff]
    %v102 = vld [vmem:[#allocation2 + $0x8] sm:$0xff]
    %v103 = vld [vmem:[#allocation2 + $0x10] sm:$0xff]
    %v104 = vld [vmem:[#allocation2 + $0x18] sm:$0xff]
    %v105 = vld [vmem:[#allocation3] sm:$0xf]
    %v106 = vld [vmem:[#allocation3 + $0x4] sm:$0xf]
    %v107 = vld [vmem:[#allocation3 + $0x8] sm:$0xf]
    %v108 = vld [vmem:[#allocation3 + $0xc] sm:$0xf]
    %v109 = vld [vmem:[#allocation6] sm:$0xf]
    %v110 = vld [vmem:[#allocation6 + $0x4] sm:$0xf]
    %v111 = vld [vmem:[#allocation6 + $0x8] sm:$0xf]
    %v112 = vld [vmem:[#allocation6 + $0xc] sm:$0xf]
    %v113 = vld [vmem:[#allocation6 + $0x10] sm:$0xf]
    %v114 = vld [vmem:[#allocation6 + $0x14] sm:$0xf]
    %v115 = vld [vmem:[#allocation6 + $0x18] sm:$0xf]
    %v116 = vld [vmem:[#allocation6 + $0x1c] sm:$0xf]
    %v117 = vld [vmem:[#allocation6 + $0x20] sm:$0xf]
    %v118 = vld [vmem:[#allocation6 + $0x24] sm:$0xf]
    %v119 = vld [vmem:[#allocation6 + $0x28] sm:$0xf]
    %v120 = vld [vmem:[#allocation6 + $0x2c] sm:$0xf]
    %v121 = vld [vmem:[#allocation6 + $0x30] sm:$0xf]
    %v122 = vld [vmem:[#allocation6 + $0x34] sm:$0xf]
    %v123 = vld [vmem:[#allocation6 + $0x38] sm:$0xf]
    %v124 = vld [vmem:[#allocation6 + $0x3c] sm:$0xf]
    %v129 = vunpack.c.l.b16 %v105
    %v130 = vunpack.c.l.b16 %v106
    %v131 = vunpack.c.l.b16 %v107
    %v132 = vunpack.c.l.b16 %v108
    %v133 = vpack.c.b16 %v130, %v129
    %v134 = vpack.c.b16 %v132, %v131
    %v153 = vunpack.c.l.b16 %v109
    %v154 = vunpack.c.l.b16 %v110
    %v155 = vunpack.c.l.b16 %v111
    %v156 = vunpack.c.l.b16 %v112
    %v157 = vunpack.c.l.b16 %v113
    %v158 = vunpack.c.l.b16 %v114
    %v159 = vunpack.c.l.b16 %v115
    %v160 = vunpack.c.l.b16 %v116
    %v161 = vunpack.c.l.b16 %v117
    %v162 = vunpack.c.l.b16 %v118
    %v163 = vunpack.c.l.b16 %v119
    %v164 = vunpack.c.l.b16 %v120
    %v165 = vunpack.c.l.b16 %v121
    %v166 = vunpack.c.l.b16 %v122
    %v167 = vunpack.c.l.b16 %v123
    %v168 = vunpack.c.l.b16 %v124
    %v169 = vpack.c.b16 %v154, %v153
    %v170 = vpack.c.b16 %v156, %v155
    %v171 = vpack.c.b16 %v158, %v157
    %v172 = vpack.c.b16 %v160, %v159
    %v173 = vpack.c.b16 %v162, %v161
    %v174 = vpack.c.b16 %v164, %v163
    %v175 = vpack.c.b16 %v166, %v165
    %v176 = vpack.c.b16 %v168, %v167
    %185 = vmatprep.subr.bf16.mxu0 0
    %186 = vmatpush1.bf16.msra.mxu0 %v176
    %187 = vmatprep.subr.bf16.mxu0 0
    %188 = vmatpush1.bf16.msra.mxu0 %v175
    %189 = vmatprep.subr.bf16.mxu0 0
    %190 = vmatpush1.bf16.msra.mxu0 %v174
    %191 = vmatprep.subr.bf16.mxu0 0
    %192 = vmatpush1.bf16.msra.mxu0 %v173
    %193 = vmatprep.subr.bf16.mxu0 0
    %194 = vmatpush1.bf16.msra.mxu0 %v172
    %195 = vmatprep.subr.bf16.mxu0 0
    %196 = vmatpush1.bf16.msra.mxu0 %v171
    %197 = vmatprep.subr.bf16.mxu0 0
    %198 = vmatpush1.bf16.msra.mxu0 %v170
    %199 = vmatprep.subr.bf16.mxu0 0
    %200 = vmatpush1.bf16.msra.mxu0 %v169
    %201 = vmatprep.subr.bf16.mxu0 0
    %202 = vmatpush2.bf16.msra.mxu0 0
    %203 = vmatprep.subr.bf16.mxu0 0
    %204 = vmatpush2.bf16.msra.mxu0 0
    %205 = vmatprep.subr.bf16.mxu0 0
    %206 = vmatpush2.bf16.msra.mxu0 0
    %207 = vmatprep.subr.bf16.mxu0 0
    %208 = vmatpush2.bf16.msra.mxu0 0
    %209 = vmatprep.subr.bf16.mxu0 0
    %210 = vmatpush2.bf16.msra.mxu0 0
    %211 = vmatprep.subr.bf16.mxu0 0
    %212 = vmatpush2.bf16.msra.mxu0 0
    %213 = vmatprep.subr.bf16.mxu0 0
    %214 = vmatpush2.bf16.msra.mxu0 0
    %215 = vmatprep.subr.bf16.mxu0 0
    %216 = vmatpush2.bf16.msra.mxu0 0
    %217 = vmatprep.mubr.bf16.mxu0 0
    %218 = vmatmul.mubr.bf16.gmra.mxu0 %v133
    %v219 = vpop.f32.mrf.mxu0
    %v220 = vadd.f32 0.0, %v219
    %v221 = vpop.f32.mrf.mxu0
    %v222 = vpop.f32.mrf.mxu0
    %v223 = vadd.f32 0.0, %v222
    %v224 = vpop.f32.mrf.mxu0
    %225 = vmatprep.mubr.bf16.mxu0 0
    %226 = vmatmul.mubr.bf16.gmra.mxu0 %v134
    %v227 = vpop.f32.mrf.mxu0
    %v228 = vadd.f32 0.0, %v227
    %v229 = vpop.f32.mrf.mxu0
    %v230 = vpop.f32.mrf.mxu0
    %v231 = vadd.f32 0.0, %v230
    %v232 = vpop.f32.mrf.mxu0
    %233 = vdwg.mxu0
    %v234 = vadd.f32 %v101, %v220
    %v235 = vadd.f32 %v102, %v223
    %v236 = vadd.f32 %v103, %v228
    %v237 = vadd.f32 %v104, %v231
    %238 = vst [vmem:[#allocation2] sm:$0xff] %v234
    %239 = vst [vmem:[#allocation2 + $0x8] sm:$0xff] %v235
    %240 = vst [vmem:[#allocation2 + $0x10] sm:$0xff] %v236
    %241 = vst [vmem:[#allocation2 + $0x18] sm:$0xff] %v237
    // Predicated region
    $region50: #{tpu_custom_call.1} parent=1 // pred_check
      %p242 = pneg %p93
    $region51: #{tpu_custom_call.1} parent=1 // pred_check_branch
      %244 = sbr.rel (%p242) target = $region53
    $region52: #{tpu_custom_call.1} parent=1 // pred_region
      %v245 = vld [vmem:[#allocation2] sm:$0xff]
      %v246 = vld [vmem:[#allocation2 + $0x8] sm:$0xff]
      %v247 = vld [vmem:[#allocation2 + $0x10] sm:$0xff]
      %v248 = vld [vmem:[#allocation2 + $0x18] sm:$0xff]
      %v249 = vpack.c.bf16 %v246, %v245
      %v250 = vpack.c.bf16 %v248, %v247
      %v251 = vld [vmem:[#allocation8] sm:$0xf]
      %v252 = vld [vmem:[#allocation8 + $0x4] sm:$0xf]
      %v253 = vld [vmem:[#allocation8 + $0x8] sm:$0xf]
      %v254 = vld [vmem:[#allocation8 + $0xc] sm:$0xf]
      %v259 = vunpack.c.l.b16 %v251
      %v260 = vunpack.c.l.b16 %v252
      %v261 = vunpack.c.l.b16 %v253
      %v262 = vunpack.c.l.b16 %v254
      %v263 = vpack.c.b16 %v260, %v259
      %v264 = vpack.c.b16 %v262, %v261
      %v267 = vld [vmem:[#allocation9] sm:$0xf]
      %v268 = vld [vmem:[#allocation9 + $0x4] sm:$0xf]
      %v269 = vld [vmem:[#allocation9 + $0x8] sm:$0xf]
      %v270 = vld [vmem:[#allocation9 + $0xc] sm:$0xf]
      %v271 = vld [vmem:[#allocation9 + $0x10] sm:$0xf]
      %v272 = vld [vmem:[#allocation9 + $0x14] sm:$0xf]
      %v273 = vld [vmem:[#allocation9 + $0x18] sm:$0xf]
      %v274 = vld [vmem:[#allocation9 + $0x1c] sm:$0xf]
      %v275 = vld [vmem:[#allocation9 + $0x20] sm:$0xf]
      %v276 = vld [vmem:[#allocation9 + $0x24] sm:$0xf]
      %v277 = vld [vmem:[#allocation9 + $0x28] sm:$0xf]
      %v278 = vld [vmem:[#allocation9 + $0x2c] sm:$0xf]
      %v279 = vld [vmem:[#allocation9 + $0x30] sm:$0xf]
      %v280 = vld [vmem:[#allocation9 + $0x34] sm:$0xf]
      %v281 = vld [vmem:[#allocation9 + $0x38] sm:$0xf]
      %v282 = vld [vmem:[#allocation9 + $0x3c] sm:$0xf]
      %v283 = vld [vmem:[#allocation9 + $0x40] sm:$0xf]
      %v284 = vld [vmem:[#allocation9 + $0x44] sm:$0xf]
      %v285 = vld [vmem:[#allocation9 + $0x48] sm:$0xf]
      %v286 = vld [vmem:[#allocation9 + $0x4c] sm:$0xf]
      %v287 = vld [vmem:[#allocation9 + $0x50] sm:$0xf]
      %v288 = vld [vmem:[#allocation9 + $0x54] sm:$0xf]
      %v289 = vld [vmem:[#allocation9 + $0x58] sm:$0xf]
      %v290 = vld [vmem:[#allocation9 + $0x5c] sm:$0xf]
      %v291 = vld [vmem:[#allocation9 + $0x60] sm:$0xf]
      %v292 = vld [vmem:[#allocation9 + $0x64] sm:$0xf]
      %v293 = vld [vmem:[#allocation9 + $0x68] sm:$0xf]
      %v294 = vld [vmem:[#allocation9 + $0x6c] sm:$0xf]
      %v295 = vld [vmem:[#allocation9 + $0x70] sm:$0xf]
      %v296 = vld [vmem:[#allocation9 + $0x74] sm:$0xf]
      %v297 = vld [vmem:[#allocation9 + $0x78] sm:$0xf]
      %v298 = vld [vmem:[#allocation9 + $0x7c] sm:$0xf]
      %v299 = vld [vmem:[%s4] sm:$0x1]
      %v301 = vlaneseq
      %v302 = vshrl.u32 %v301, 7
      %v303 = vsub.s32 0, %v302
      %v304 = vrot.slane %v299, %v303
      %v338 = vunpack.c.l.b16 %v267
      %v339 = vunpack.c.l.b16 %v268
      %v340 = vunpack.c.l.b16 %v269
      %v341 = vunpack.c.l.b16 %v270
      %v342 = vunpack.c.l.b16 %v271
      %v343 = vunpack.c.l.b16 %v272
      %v344 = vunpack.c.l.b16 %v273
      %v345 = vunpack.c.l.b16 %v274
      %v346 = vunpack.c.l.b16 %v275
      %v347 = vunpack.c.l.b16 %v276
      %v348 = vunpack.c.l.b16 %v277
      %v349 = vunpack.c.l.b16 %v278
      %v350 = vunpack.c.l.b16 %v279
      %v351 = vunpack.c.l.b16 %v280
      %v352 = vunpack.c.l.b16 %v281
      %v353 = vunpack.c.l.b16 %v282
      %v354 = vunpack.c.l.b16 %v283
      %v355 = vunpack.c.l.b16 %v284
      %v356 = vunpack.c.l.b16 %v285
      %v357 = vunpack.c.l.b16 %v286
      %v358 = vunpack.c.l.b16 %v287
      %v359 = vunpack.c.l.b16 %v288
      %v360 = vunpack.c.l.b16 %v289
      %v361 = vunpack.c.l.b16 %v290
      %v362 = vunpack.c.l.b16 %v291
      %v363 = vunpack.c.l.b16 %v292
      %v364 = vunpack.c.l.b16 %v293
      %v365 = vunpack.c.l.b16 %v294
      %v366 = vunpack.c.l.b16 %v295
      %v367 = vunpack.c.l.b16 %v296
      %v368 = vunpack.c.l.b16 %v297
      %v369 = vunpack.c.l.b16 %v298
      %v370 = vpack.c.b16 %v339, %v338
      %v371 = vpack.c.b16 %v341, %v340
      %v372 = vpack.c.b16 %v343, %v342
      %v373 = vpack.c.b16 %v345, %v344
      %v374 = vpack.c.b16 %v347, %v346
      %v375 = vpack.c.b16 %v349, %v348
      %v376 = vpack.c.b16 %v351, %v350
      %v377 = vpack.c.b16 %v353, %v352
      %v378 = vpack.c.b16 %v355, %v354
      %v379 = vpack.c.b16 %v357, %v356
      %v380 = vpack.c.b16 %v359, %v358
      %v381 = vpack.c.b16 %v361, %v360
      %v382 = vpack.c.b16 %v363, %v362
      %v383 = vpack.c.b16 %v365, %v364
      %v384 = vpack.c.b16 %v367, %v366
      %v385 = vpack.c.b16 %v369, %v368
      %402 = vmatprep.subr.bf16.mxu0 0
      %403 = vmatpush1.bf16.msra.mxu0 %v377
      %404 = vmatprep.subr.bf16.mxu0 0
      %405 = vmatpush1.bf16.msra.mxu0 %v376
      %406 = vmatprep.subr.bf16.mxu0 0
      %407 = vmatpush1.bf16.msra.mxu0 %v375
      %408 = vmatprep.subr.bf16.mxu0 0
      %409 = vmatpush1.bf16.msra.mxu0 %v374
      %410 = vmatprep.subr.bf16.mxu0 0
      %411 = vmatpush1.bf16.msra.mxu0 %v373
      %412 = vmatprep.subr.bf16.mxu0 0
      %413 = vmatpush1.bf16.msra.mxu0 %v372
      %414 = vmatprep.subr.bf16.mxu0 0
      %415 = vmatpush1.bf16.msra.mxu0 %v371
      %416 = vmatprep.subr.bf16.mxu0 0
      %417 = vmatpush1.bf16.msra.mxu0 %v370
      %418 = vmatprep.subr.bf16.mxu0 0
      %419 = vmatpush2.bf16.msra.mxu0 %v385
      %420 = vmatprep.subr.bf16.mxu0 0
      %421 = vmatpush2.bf16.msra.mxu0 %v384
      %422 = vmatprep.subr.bf16.mxu0 0
      %423 = vmatpush2.bf16.msra.mxu0 %v383
      %424 = vmatprep.subr.bf16.mxu0 0
      %425 = vmatpush2.bf16.msra.mxu0 %v382
      %426 = vmatprep.subr.bf16.mxu0 0
      %427 = vmatpush2.bf16.msra.mxu0 %v381
      %428 = vmatprep.subr.bf16.mxu0 0
      %429 = vmatpush2.bf16.msra.mxu0 %v380
      %430 = vmatprep.subr.bf16.mxu0 0
      %431 = vmatpush2.bf16.msra.mxu0 %v379
      %432 = vmatprep.subr.bf16.mxu0 0
      %433 = vmatpush2.bf16.msra.mxu0 %v378
      %434 = vmatprep.mubr.bf16.mxu0 %v263
      %435 = vmatmul.mubr.bf16.gmra.mxu0 %v249
      %v436 = vpop.f32.mrf.mxu0
      %v437 = vadd.f32 %v304, %v436
      %v438 = vpop.f32.mrf.mxu0
      %v439 = vpop.f32.mrf.mxu0
      %v440 = vadd.f32 %v304, %v439
      %v441 = vpop.f32.mrf.mxu0
      %442 = vmatprep.mubr.bf16.mxu0 %v264
      %443 = vmatmul.mubr.bf16.gmra.mxu0 %v250
      %v444 = vpop.f32.mrf.mxu0
      %v445 = vadd.f32 %v304, %v444
      %v446 = vpop.f32.mrf.mxu0
      %v447 = vpop.f32.mrf.mxu0
      %v448 = vadd.f32 %v304, %v447
      %v449 = vpop.f32.mrf.mxu0
      %450 = vdwg.mxu0
      %v451 = vmax.f32 %v437, 0.0
      %v452 = vmax.f32 %v440, 0.0
      %v453 = vmax.f32 %v445, 0.0
      %v454 = vmax.f32 %v448, 0.0
      %v455 = vld [vmem:[#allocation11] sm:$0xff]
      %v456 = vld [vmem:[#allocation11 + $0x8] sm:$0xff]
      %v457 = vld [vmem:[#allocation11 + $0x10] sm:$0xff]
      %v458 = vld [vmem:[#allocation11 + $0x18] sm:$0xff]
      %v459 = vmul.f32 %v451, %v455
      %v460 = vmul.f32 %v452, %v456
      %v461 = vmul.f32 %v453, %v457
      %v462 = vmul.f32 %v454, %v458
      %463 = vst [vmem:[#allocation12] sm:$0xff] %v459
      %464 = vst [vmem:[#allocation12 + $0x8] sm:$0xff] %v460
      %465 = vst [vmem:[#allocation12 + $0x10] sm:$0xff] %v461
      %466 = vst [vmem:[#allocation12 + $0x18] sm:$0xff] %v462
    $region53: #{tpu_custom_call.1} parent=1 // pred_fallthru
      _
    // Predicated region
    $region54: #{tpu_custom_call.1} parent=1 // pred_check
      _
    $region55: #{tpu_custom_call.1} parent=1 // pred_check_branch
      %468 = sbr.rel (0) target = $region57
    $region56: #{tpu_custom_call.1} parent=1 // pred_region
      %s470 = ssub.s32 512, 512
      %471 = vsyncadd [#allocation5], %s470
      %s472 = sshll.u32 [#allocation12], 4
      %s473 = int_to_ptr.vmem [resolvable:$true] %s472
      %478 = dma.vmem_to_hbm [thread:$0]  %s473, 512, %s6, [#allocation5], 128, 128, 8
    $region57: #{tpu_custom_call.1} parent=1 // pred_fallthru
      _
    // Predicated region
    $region58: #{tpu_custom_call.1} parent=1 // pred_check
      _
    $region59: #{tpu_custom_call.1} parent=1 // pred_check_branch
      %480 = sbr.rel (0) target = $region61
    $region60: #{tpu_custom_call.1} parent=1 // pred_region
      %481 = dma.done [#allocation5], 512
    $region61: #{tpu_custom_call.1} parent=1 // pred_fallthru
      _
    %482 = vsyncpa [#allocation4], 1
    %483 = vsyncpa [#allocation7], 1
    %484 = vsyncpa [#allocation10], 1
    %485 = vsyncpa [#allocation5], 1

</llo_original>
